<compile_context>
chip_gen: v6e
topology: v6e:2x2x1
jax: 0.10.0
libtpu: 0.0.40
codegen_flags: <defaults>
</compile_context>

<pallas_src>
import jax
import jax.numpy as jnp
from jax.experimental import pallas as pl
from jax.experimental.pallas import tpu as pltpu


def _leaky(x, slope=0.1):
    return jnp.where(x >= 0, x, slope * x)


def _round_up(x, m):
    return ((x + m - 1) // m) * m


def _cdiv(a, b):
    return -(-a // b)


def add_fusion_kernel(x2d_ref, x3d_ref, w1t_ref, b1_ref, w2t_ref, b2_ref, o_ref):
    # x2d_ref: (1, C2d, TM)   x3d_ref: (1, C3d, TM)   (pixels on lanes)
    # w1t_ref: (Cout, C2d)    w2t_ref: (Cout, C3d)    biases: (Cout, 1)
    # o_ref:   (1, Cout, TM)  -> lane-dense stores
    a = jnp.dot(w1t_ref[...], x2d_ref[0], preferred_element_type=jnp.float32)
    a = _leaky(a + b1_ref[...])          # align1: 1x1 conv + LeakyReLU(0.1)

    b = jnp.dot(w2t_ref[...], x3d_ref[0], preferred_element_type=jnp.float32)
    b = _leaky(b + b2_ref[...])          # align2: 1x1 conv + LeakyReLU(0.1)

    o_ref[0] = _leaky(a + b).astype(o_ref.dtype)   # final LeakyReLU(0.1)


def add_fusion(feat_2d, feat_3d, w1, b1, w2, b2, *, tm=8192,
               vmem_tile_budget_bytes=16 * 1024 * 1024):
    """feat_2d: (N, C2d, H, W); feat_3d: (N, C3d, H, W) -> (N, Cout, H, W).

    w1: (C2d, Cout), w2: (C3d, Cout), b1/b2: (Cout,).
    (Note: PyTorch Conv2d stores weights as (Cout, Cin, 1, 1) — transpose when
    porting checkpoints.)
    """
    N, C2d, H, W = feat_2d.shape
    _, C3d, _, _ = feat_3d.shape
    Cout = w1.shape[1]
    HW = H * W

    # NCHW-native: just flatten the spatial dims (no transpose, no copy).
    x2d = feat_2d.reshape(N, C2d, HW)
    x3d = feat_3d.reshape(N, C3d, HW)

    # Pixel-tile sizing:
    #   * lane-aligned (multiple of 128),
    #   * capped by the (lane-rounded) spatial extent,
    #   * capped so double-buffered in+out tiles fit the VMEM budget
    #     (works unchanged on v5e/v6e 128 MiB and v7x 64 MiB parts).
    itemsize = jnp.dtype(feat_2d.dtype).itemsize
    per_pixel_bytes = (C2d + C3d + Cout) * itemsize
    tm_vmem_cap = max(128, (vmem_tile_budget_bytes // (2 * per_pixel_bytes)) // 128 * 128)
    tm_eff = min(_round_up(tm, 128), _round_up(HW, 128), tm_vmem_cap)
    n_tiles = _cdiv(HW, tm_eff)

    # Keep >= 2 grid steps so both v7x TensorCores get work (no-op on v5e/v6e).
    while N * n_tiles < 2 and tm_eff > 128:
        tm_eff = max(128, _round_up(tm_eff // 2, 128))
        n_tiles = _cdiv(HW, tm_eff)

    # Weights transposed once (tiny) so the kernel computes w.T @ x directly.
    w1t = w1.T                      # (Cout, C2d)
    w2t = w2.T                      # (Cout, C3d)
    b1r = b1.reshape(Cout, 1)
    b2r = b2.reshape(Cout, 1)

    grid = (N, n_tiles)

    out = pl.pallas_call(
        add_fusion_kernel,
        out_shape=jax.ShapeDtypeStruct((N, Cout, HW), feat_2d.dtype),
        grid_spec=pltpu.PrefetchScalarGridSpec(
            num_scalar_prefetch=0,
            grid=grid,
            in_specs=[
                pl.BlockSpec((1, C2d, tm_eff), lambda n, i: (n, 0, i)),
                pl.BlockSpec((1, C3d, tm_eff), lambda n, i: (n, 0, i)),
                pl.BlockSpec((Cout, C2d), lambda n, i: (0, 0)),
                pl.BlockSpec((Cout, 1), lambda n, i: (0, 0)),
                pl.BlockSpec((Cout, C3d), lambda n, i: (0, 0)),
                pl.BlockSpec((Cout, 1), lambda n, i: (0, 0)),
            ],
            out_specs=pl.BlockSpec((1, Cout, tm_eff), lambda n, i: (n, 0, i)),
        ),
        compiler_params=pltpu.CompilerParams(
            dimension_semantics=("parallel", "parallel"),
            vmem_limit_bytes=32 * 1024 * 1024),
    )(x2d, x3d, w1t, b1r, w2t, b2r)

    return out.reshape(N, Cout, H, W)


def _reference(feat_2d, feat_3d, w1, b1, w2, b2):
    """Pure-JAX reference for correctness check."""
    def conv1x1(x, w, b):  # x: (N,C,H,W), w: (Cin,Cout)
        y = jnp.einsum('nchw,co->nohw', x, w) + b[None, :, None, None]
        return _leaky(y)
    return _leaky(conv1x1(feat_2d, w1, b1) + conv1x1(feat_3d, w2, b2))


def _run_case(key, N, C2d, C3d, Cout, H, W, **kw):
    k1, k2, k3, k4, k5, k6 = jax.random.split(key, 6)
    feat_2d = jax.random.normal(k1, (N, C2d, H, W), jnp.float32)
    feat_3d = jax.random.normal(k2, (N, C3d, H, W), jnp.float32)
    w1 = jax.random.normal(k3, (C2d, Cout), jnp.float32) * 0.1
    b1 = jax.random.normal(k4, (Cout,), jnp.float32) * 0.1
    w2 = jax.random.normal(k5, (C3d, Cout), jnp.float32) * 0.1
    b2 = jax.random.normal(k6, (Cout,), jnp.float32) * 0.1

    out = jax.block_until_ready(add_fusion(feat_2d, feat_3d, w1, b1, w2, b2, **kw))
    ref = _reference(feat_2d, feat_3d, w1, b1, w2, b2)
    assert out.shape == (N, Cout, H, W)
    assert jnp.allclose(out, ref, atol=1e-5, rtol=1e-5)


if __name__ == "__main__":
    key = jax.random.PRNGKey(0)
    k_a, k_b = jax.random.split(key, 2)

    # Case 1: nominal small shapes (nchw path, norm=None), one lane-aligned tile.
    _run_case(k_a, N=2, C2d=4, C3d=6, Cout=8, H=16, W=16)

    # Case 2: HW not a multiple of 128, multiple pixel tiles -> exercises the
    # masked boundary-block write path (no wrapper pad / slice).
    _run_case(k_b, N=1, C2d=4, C3d=6, Cout=8, H=13, W=21, tm=128)

    # TODO(synk): norm != None (BatchNorm/InstanceNorm inside Conv2dNormRelu)
    # is not implemented; this kernel covers the norm=None forward only.
    print("KERNEL_OK")
</pallas_src>

<mosaic_0001>
module attributes {stable_mosaic.version = 11 : i64} {
  func.func @add_fusion_kernel(%arg0: i32, %arg1: i32, %arg2: memref<1x4x256xf32, #tpu.memory_space<vmem>>, %arg3: memref<1x6x256xf32, #tpu.memory_space<vmem>>, %arg4: memref<8x4xf32, #tpu.memory_space<vmem>>, %arg5: memref<8x1xf32, #tpu.memory_space<vmem>>, %arg6: memref<8x6xf32, #tpu.memory_space<vmem>>, %arg7: memref<8x1xf32, #tpu.memory_space<vmem>>, %arg8: memref<1x8x256xf32, #tpu.memory_space<vmem>>) attributes {dimension_semantics = [#tpu.dimension_semantics<parallel>, #tpu.dimension_semantics<parallel>], iteration_bounds = array<i64: 2, 1>, scalar_prefetch = 0 : i64, scratch_operands = 0 : i64, tpu.core_type = #tpu.core_type<tc>, window_params = [{transform_indices = @transform_0, window_bounds = array<i64: 1, 4, 256>}, {transform_indices = @transform_1, window_bounds = array<i64: 1, 6, 256>}, {pipeline_mode = #tpu.pipeline_mode<synchronous>, transform_indices = @transform_2, window_bounds = array<i64: 8, 4>}, {pipeline_mode = #tpu.pipeline_mode<synchronous>, transform_indices = @transform_3, window_bounds = array<i64: 8, 1>}, {pipeline_mode = #tpu.pipeline_mode<synchronous>, transform_indices = @transform_4, window_bounds = array<i64: 8, 6>}, {pipeline_mode = #tpu.pipeline_mode<synchronous>, transform_indices = @transform_5, window_bounds = array<i64: 8, 1>}, {transform_indices = @transform_6, window_bounds = array<i64: 1, 8, 256>}]} {
    %c0 = arith.constant 0 : index
    %c0_0 = arith.constant 0 : index
    %0 = vector.load %arg4[%c0, %c0_0] : memref<8x4xf32, #tpu.memory_space<vmem>>, vector<8x4xf32>
    %c0_1 = arith.constant 0 : index
    %c0_2 = arith.constant 0 : index
    %c0_3 = arith.constant 0 : index
    %1 = vector.load %arg2[%c0_1, %c0_2, %c0_3] : memref<1x4x256xf32, #tpu.memory_space<vmem>>, vector<1x4x256xf32>
    %2 = vector.shape_cast %1 : vector<1x4x256xf32> to vector<4x256xf32>
    %cst = arith.constant dense<0.000000e+00> : vector<8x256xf32>
    %3 = tpu.matmul %0, %2, %cst {dimension_numbers = #tpu.dot_dimension_numbers<[1], [0], [0], [1], [0, 0, 1, 1], [], []>} : vector<8x4xf32>, vector<4x256xf32>, vector<8x256xf32> -> vector<8x256xf32>
    %c0_4 = arith.constant 0 : index
    %c0_5 = arith.constant 0 : index
    %4 = vector.load %arg5[%c0_4, %c0_5] : memref<8x1xf32, #tpu.memory_space<vmem>>, vector<8x1xf32>
    %5 = vector.broadcast %4 : vector<8x1xf32> to vector<8x256xf32>
    %6 = arith.addf %3, %5 : vector<8x256xf32>
    %cst_6 = arith.constant 0.000000e+00 : f32
    %7 = vector.broadcast %cst_6 : f32 to vector<8x256xf32>
    %8 = arith.cmpf oge, %6, %7 : vector<8x256xf32>
    %cst_7 = arith.constant 1.000000e-01 : f32
    %9 = vector.broadcast %cst_7 : f32 to vector<8x256xf32>
    %10 = arith.mulf %9, %6 : vector<8x256xf32>
    %11 = arith.select %8, %6, %10 : vector<8x256xi1>, vector<8x256xf32>
    %c0_8 = arith.constant 0 : index
    %c0_9 = arith.constant 0 : index
    %12 = vector.load %arg6[%c0_8, %c0_9] : memref<8x6xf32, #tpu.memory_space<vmem>>, vector<8x6xf32>
    %c0_10 = arith.constant 0 : index
    %c0_11 = arith.constant 0 : index
    %c0_12 = arith.constant 0 : index
    %13 = vector.load %arg3[%c0_10, %c0_11, %c0_12] : memref<1x6x256xf32, #tpu.memory_space<vmem>>, vector<1x6x256xf32>
    %14 = vector.shape_cast %13 : vector<1x6x256xf32> to vector<6x256xf32>
    %cst_13 = arith.constant dense<0.000000e+00> : vector<8x256xf32>
    %15 = tpu.matmul %12, %14, %cst_13 {dimension_numbers = #tpu.dot_dimension_numbers<[1], [0], [0], [1], [0, 0, 1, 1], [], []>} : vector<8x6xf32>, vector<6x256xf32>, vector<8x256xf32> -> vector<8x256xf32>
    %c0_14 = arith.constant 0 : index
    %c0_15 = arith.constant 0 : index
    %16 = vector.load %arg7[%c0_14, %c0_15] : memref<8x1xf32, #tpu.memory_space<vmem>>, vector<8x1xf32>
    %17 = vector.broadcast %16 : vector<8x1xf32> to vector<8x256xf32>
    %18 = arith.addf %15, %17 : vector<8x256xf32>
    %cst_16 = arith.constant 0.000000e+00 : f32
    %19 = vector.broadcast %cst_16 : f32 to vector<8x256xf32>
    %20 = arith.cmpf oge, %18, %19 : vector<8x256xf32>
    %cst_17 = arith.constant 1.000000e-01 : f32
    %21 = vector.broadcast %cst_17 : f32 to vector<8x256xf32>
    %22 = arith.mulf %21, %18 : vector<8x256xf32>
    %23 = arith.select %20, %18, %22 : vector<8x256xi1>, vector<8x256xf32>
    %24 = arith.addf %11, %23 : vector<8x256xf32>
    %cst_18 = arith.constant 0.000000e+00 : f32
    %25 = vector.broadcast %cst_18 : f32 to vector<8x256xf32>
    %26 = arith.cmpf oge, %24, %25 : vector<8x256xf32>
    %cst_19 = arith.constant 1.000000e-01 : f32
    %27 = vector.broadcast %cst_19 : f32 to vector<8x256xf32>
    %28 = arith.mulf %27, %24 : vector<8x256xf32>
    %29 = arith.select %26, %24, %28 : vector<8x256xi1>, vector<8x256xf32>
    %c0_20 = arith.constant 0 : index
    %c0_21 = arith.constant 0 : index
    %c0_22 = arith.constant 0 : index
    %30 = vector.load %arg8[%c0_20, %c0_21, %c0_22] : memref<1x8x256xf32, #tpu.memory_space<vmem>>, vector<1x8x256xf32>
    %31 = vector.shape_cast %30 : vector<1x8x256xf32> to vector<8x256xf32>
    %32 = vector.shape_cast %29 : vector<8x256xf32> to vector<1x8x256xf32>
    tpu.vector_store %arg8[%c0_20, %c0_21, %c0_22], %32 {strides = array<i32>} : memref<1x8x256xf32, #tpu.memory_space<vmem>>, vector<1x8x256xf32>,
    return
  }
  func.func @transform_0(%arg0: i32, %arg1: i32) -> (i32, i32, i32) {
    %c0_i32 = arith.constant 0 : i32
    %c0_i32_0 = arith.constant 0 : i32
    return %arg0, %c0_i32, %arg1 : i32, i32, i32
  }
  func.func @transform_1(%arg0: i32, %arg1: i32) -> (i32, i32, i32) {
    %c0_i32 = arith.constant 0 : i32
    %c0_i32_0 = arith.constant 0 : i32
    return %arg0, %c0_i32, %arg1 : i32, i32, i32
  }
  func.func @transform_2(%arg0: i32, %arg1: i32) -> (i32, i32) {
    %c0_i32 = arith.constant 0 : i32
    %c0_i32_0 = arith.constant 0 : i32
    %c0_i32_1 = arith.constant 0 : i32
    return %c0_i32, %c0_i32_0 : i32, i32
  }
  func.func @transform_3(%arg0: i32, %arg1: i32) -> (i32, i32) {
    %c0_i32 = arith.constant 0 : i32
    %c0_i32_0 = arith.constant 0 : i32
    %c0_i32_1 = arith.constant 0 : i32
    return %c0_i32, %c0_i32_0 : i32, i32
  }
  func.func @transform_4(%arg0: i32, %arg1: i32) -> (i32, i32) {
    %c0_i32 = arith.constant 0 : i32
    %c0_i32_0 = arith.constant 0 : i32
    %c0_i32_1 = arith.constant 0 : i32
    return %c0_i32, %c0_i32_0 : i32, i32
  }
  func.func @transform_5(%arg0: i32, %arg1: i32) -> (i32, i32) {
    %c0_i32 = arith.constant 0 : i32
    %c0_i32_0 = arith.constant 0 : i32
    %c0_i32_1 = arith.constant 0 : i32
    return %c0_i32, %c0_i32_0 : i32, i32
  }
  func.func @transform_6(%arg0: i32, %arg1: i32) -> (i32, i32, i32) {
    %c0_i32 = arith.constant 0 : i32
    %c0_i32_0 = arith.constant 0 : i32
    return %arg0, %c0_i32, %arg1 : i32, i32, i32
  }
}

</mosaic_0001>

<llo_original>
// kernel: tpu_custom_call.1
$region0: #{tpu_custom_call.1}
  #allocation0 [shape = 'u32[]', space=smem, size = 0x4, offset = 0x4, fixed_abs, tag = 'smem constant byte address 0x4 - core index']
  #allocation1 [shape = 'u32[144,128]{1,0:T(1,128)}', space=vmem, size = 0x12000, scoped, tag = 'internal scratch']
  %s0 = inlined_call_operand.vmem [shape: f32[2,4,256], index: 0, kind: input, shape index: {}]
  %s1 = inlined_call_operand.vmem [shape: f32[2,6,256], index: 1, kind: input, shape index: {}]
  %s2 = inlined_call_operand.vmem [shape: f32[8,4], index: 2, kind: input, shape index: {}]
  %s3 = inlined_call_operand.vmem [shape: f32[8,1], index: 3, kind: input, shape index: {}]
  %s4 = inlined_call_operand.vmem [shape: f32[8,6], index: 4, kind: input, shape index: {}]
  %s5 = inlined_call_operand.vmem [shape: f32[8,1], index: 5, kind: input, shape index: {}]
  %s6 = inlined_call_operand.hbm [shape: f32[2,8,256], index: 6, kind: output, shape index: {}]
  %s7 = sld [smem:[#allocation0]]
  $region57: #{tpu_custom_call.1} parent=0
    _
  %s9 = ssub.s32 1, %s7
  %s10 = scalar_select 0, %s9, %s7
  $region1: #{tpu_custom_call.1} parent=0
    #allocation2 [shape = 'u8[16384]{0}', space=vmem, size = 0x4000, scoped, tag = 'output window, operand 0']
    #allocation3 [shape = 's32[2]{0}', space=sflag, size = 0x8, scoped, tag = 'scoped memory for tpu_custom_call.1']
    %11 = vsyncpa [#allocation3], 0
    %s12 = scalar_lea.sflag [#allocation3], 1
    %13 = vsyncpa %s12, 0
    loop: start=0, step=1, limit=4
    $region2: #{tpu_custom_call.1} parent=1 // loop_pre_header
      _
    $region3: #{tpu_custom_call.1} parent=1 // loop_header
      %s15 = sphi 0, %s19
      %p16 = scmp.ge.s32.totalorder %s15, 4
      %s22 = sphi 0, %s34
      %s23 = sphi 0, %s30
      %s24 = sphi 0, %s22
      %s25 = sphi 0, %s23
      %s26 = sphi 0, %s24
      %s27 = sphi 0, %s25
      %s39 = sphi 0, %s41
      %s42 = sphi 0, %s39
      %s43 = sphi 0, %s42
      %s59 = sphi 0, %s43
      %s67 = sphi 0, %s69
      %s70 = sphi 0, %s67
      %s71 = sphi 0, %s70
      %s87 = sphi 0, %s71
      %s91 = sphi 0, %s91
      %s93 = sphi 0, %s91
      %s94 = sphi 0, %s93
      %s108 = sphi 0, %s94
      %s112 = sphi 0, %s112
      %s114 = sphi 0, %s112
      %s115 = sphi 0, %s114
      %s129 = sphi 0, %s115
      %s133 = sphi 0, %s133
      %s135 = sphi 0, %s133
      %s136 = sphi 0, %s135
      %s150 = sphi 0, %s136
      %s154 = sphi 0, %s154
      %s156 = sphi 0, %s154
      %s157 = sphi 0, %s156
      %s171 = sphi 0, %s157
      %s179 = sphi 0, %s181
      %s182 = sphi 0, %s179
      %s183 = sphi 0, %s182
      %s199 = sphi 0, %s183
    $region4: #{tpu_custom_call.1} parent=1 // loop_header_branch
      %18 = sbr.rel (%p16) target = $region8
    $region5: #{tpu_custom_call.1} parent=1 // loop_body
      %s20 = ssub.s32 %s15, 1
      %s21 = ssub.s32 %s15, 2
      %s28 = sadd.s32 1, %s23
      %p29 = scmp.ge.s32.totalorder %s28, 1
      %s30 = scalar_select %p29, 0, %s28
      %s31 = sadd.s32 1, %s22
      %s32 = scalar_select %p29, %s31, %s22
      %p33 = scmp.ge.s32.totalorder %s32, 2
      %s34 = scalar_select %p33, 0, %s32
      %s35 = ssub.s32 %s22, %s34
      %s36 = ssub.s32 %s23, %s30
      %s37 = sor.u32 %s35, %s36
      %p38 = scmp.eq.s32.totalorder %s37, 0
      %s40 = sadd.s32 %s39, 1
      %s41 = scalar_select %p38, %s39, %s40
      %p44 = pneg %p38
      %p45 = scmp.eq.s32.totalorder %s15, 1
      %p46 = por %p44, %p45
      %p47 = scmp.ne.s32.totalorder %s39, %s42
      %p48 = scmp.eq.s32.totalorder %s15, 0
      %p49 = por %p47, %p48
      %p50 = scmp.ne.s32.totalorder %s39, %s42
      %p51 = scmp.eq.s32.totalorder %s20, 1
      %p52 = por %p50, %p51
      %p53 = scmp.ne.s32.totalorder %s42, %s43
      %p54 = scmp.eq.s32.totalorder %s20, 0
      %p55 = por %p53, %p54
      %p56 = scmp.ne.s32.totalorder %s42, %s43
      %p57 = scmp.eq.s32.totalorder %s21, 1
      %p58 = por %p56, %p57
      %p60 = scmp.ne.s32.totalorder %s43, %s59
      %p61 = scmp.eq.s32.totalorder %s21, 0
      %p62 = por %p60, %p61
      %s63 = ssub.s32 %s22, %s34
      %s64 = ssub.s32 %s23, %s30
      %s65 = sor.u32 %s63, %s64
      %p66 = scmp.eq.s32.totalorder %s65, 0
      %s68 = sadd.s32 %s67, 1
      %s69 = scalar_select %p66, %s67, %s68
      %p72 = pneg %p66
      %p73 = scmp.eq.s32.totalorder %s15, 1
      %p74 = por %p72, %p73
      %p75 = scmp.ne.s32.totalorder %s67, %s70
      %p76 = scmp.eq.s32.totalorder %s15, 0
      %p77 = por %p75, %p76
      %p78 = scmp.ne.s32.totalorder %s67, %s70
      %p79 = scmp.eq.s32.totalorder %s20, 1
      %p80 = por %p78, %p79
      %p81 = scmp.ne.s32.totalorder %s70, %s71
      %p82 = scmp.eq.s32.totalorder %s20, 0
      %p83 = por %p81, %p82
      %p84 = scmp.ne.s32.totalorder %s70, %s71
      %p85 = scmp.eq.s32.totalorder %s21, 1
      %p86 = por %p84, %p85
      %p88 = scmp.ne.s32.totalorder %s71, %s87
      %p89 = scmp.eq.s32.totalorder %s21, 0
      %p90 = por %p88, %p89
      %s92 = sadd.s32 %s91, 1
      %p95 = scmp.eq.s32.totalorder %s15, 1
      %p96 = scmp.ne.s32.totalorder %s91, %s93
      %p97 = scmp.eq.s32.totalorder %s15, 0
      %p98 = por %p96, %p97
      %p99 = scmp.ne.s32.totalorder %s91, %s93
      %p100 = scmp.eq.s32.totalorder %s20, 1
      %p101 = por %p99, %p100
      %p102 = scmp.ne.s32.totalorder %s93, %s94
      %p103 = scmp.eq.s32.totalorder %s20, 0
      %p104 = por %p102, %p103
      %p105 = scmp.ne.s32.totalorder %s93, %s94
      %p106 = scmp.eq.s32.totalorder %s21, 1
      %p107 = por %p105, %p106
      %p109 = scmp.ne.s32.totalorder %s94, %s108
      %p110 = scmp.eq.s32.totalorder %s21, 0
      %p111 = por %p109, %p110
      %s113 = sadd.s32 %s112, 1
      %p116 = scmp.eq.s32.totalorder %s15, 1
      %p117 = scmp.ne.s32.totalorder %s112, %s114
      %p118 = scmp.eq.s32.totalorder %s15, 0
      %p119 = por %p117, %p118
      %p120 = scmp.ne.s32.totalorder %s112, %s114
      %p121 = scmp.eq.s32.totalorder %s20, 1
      %p122 = por %p120, %p121
      %p123 = scmp.ne.s32.totalorder %s114, %s115
      %p124 = scmp.eq.s32.totalorder %s20, 0
      %p125 = por %p123, %p124
      %p126 = scmp.ne.s32.totalorder %s114, %s115
      %p127 = scmp.eq.s32.totalorder %s21, 1
      %p128 = por %p126, %p127
      %p130 = scmp.ne.s32.totalorder %s115, %s129
      %p131 = scmp.eq.s32.totalorder %s21, 0
      %p132 = por %p130, %p131
      %s134 = sadd.s32 %s133, 1
      %p137 = scmp.eq.s32.totalorder %s15, 1
      %p138 = scmp.ne.s32.totalorder %s133, %s135
      %p139 = scmp.eq.s32.totalorder %s15, 0
      %p140 = por %p138, %p139
      %p141 = scmp.ne.s32.totalorder %s133, %s135
      %p142 = scmp.eq.s32.totalorder %s20, 1
      %p143 = por %p141, %p142
      %p144 = scmp.ne.s32.totalorder %s135, %s136
      %p145 = scmp.eq.s32.totalorder %s20, 0
      %p146 = por %p144, %p145
      %p147 = scmp.ne.s32.totalorder %s135, %s136
      %p148 = scmp.eq.s32.totalorder %s21, 1
      %p149 = por %p147, %p148
      %p151 = scmp.ne.s32.totalorder %s136, %s150
      %p152 = scmp.eq.s32.totalorder %s21, 0
      %p153 = por %p151, %p152
      %s155 = sadd.s32 %s154, 1
      %p158 = scmp.eq.s32.totalorder %s15, 1
      %p159 = scmp.ne.s32.totalorder %s154, %s156
      %p160 = scmp.eq.s32.totalorder %s15, 0
      %p161 = por %p159, %p160
      %p162 = scmp.ne.s32.totalorder %s154, %s156
      %p163 = scmp.eq.s32.totalorder %s20, 1
      %p164 = por %p162, %p163
      %p165 = scmp.ne.s32.totalorder %s156, %s157
      %p166 = scmp.eq.s32.totalorder %s20, 0
      %p167 = por %p165, %p166
      %p168 = scmp.ne.s32.totalorder %s156, %s157
      %p169 = scmp.eq.s32.totalorder %s21, 1
      %p170 = por %p168, %p169
      %p172 = scmp.ne.s32.totalorder %s157, %s171
      %p173 = scmp.eq.s32.totalorder %s21, 0
      %p174 = por %p172, %p173
      %s175 = ssub.s32 %s22, %s34
      %s176 = ssub.s32 %s23, %s30
      %s177 = sor.u32 %s175, %s176
      %p178 = scmp.eq.s32.totalorder %s177, 0
      %s180 = sadd.s32 %s179, 1
      %s181 = scalar_select %p178, %s179, %s180
      %p184 = pneg %p178
      %p185 = scmp.eq.s32.totalorder %s15, 1
      %p186 = por %p184, %p185
      %p187 = scmp.ne.s32.totalorder %s179, %s182
      %p188 = scmp.eq.s32.totalorder %s15, 0
      %p189 = por %p187, %p188
      %p190 = scmp.ne.s32.totalorder %s179, %s182
      %p191 = scmp.eq.s32.totalorder %s20, 1
      %p192 = por %p190, %p191
      %p193 = scmp.ne.s32.totalorder %s182, %s183
      %p194 = scmp.eq.s32.totalorder %s20, 0
      %p195 = por %p193, %p194
      %p196 = scmp.ne.s32.totalorder %s182, %s183
      %p197 = scmp.eq.s32.totalorder %s21, 1
      %p198 = por %p196, %p197
      %p200 = scmp.ne.s32.totalorder %s183, %s199
      %p201 = scmp.eq.s32.totalorder %s21, 0
      %p202 = por %p200, %p201
      %p203 = scmp.le.s32.totalorder 1, %s15
      %p204 = scmp.lt.s32.totalorder %s15, 3
      %p205 = pnand %p203, %p204
      %p206 = pneg %p205
      // Predicated region
      $region9: #{tpu_custom_call.1} parent=5 // pred_check
        _
      $region10: #{tpu_custom_call.1} parent=5 // pred_check_branch
        %208 = sbr.rel (%p205) target = $region12
      $region11: #{tpu_custom_call.1} parent=5 // pred_region
        %s209 = ssub.s32 %s15, 1
        // Predicated region
        $region13: #{tpu_custom_call.1} parent=11 // pred_check
          %p210 = pneg %p104
        $region14: #{tpu_custom_call.1} parent=11 // pred_check_branch
          %212 = sbr.rel (%p210) target = $region16
        $region15: #{tpu_custom_call.1} parent=11 // pred_region
          _
        $region16: #{tpu_custom_call.1} parent=11 // pred_fallthru
          _
        // Predicated region
        $region17: #{tpu_custom_call.1} parent=11 // pred_check
          %p213 = pneg %p125
        $region18: #{tpu_custom_call.1} parent=11 // pred_check_branch
          %215 = sbr.rel (%p213) target = $region20
        $region19: #{tpu_custom_call.1} parent=11 // pred_region
          _
        $region20: #{tpu_custom_call.1} parent=11 // pred_fallthru
          _
        // Predicated region
        $region21: #{tpu_custom_call.1} parent=11 // pred_check
          %p216 = pneg %p146
        $region22: #{tpu_custom_call.1} parent=11 // pred_check_branch
          %218 = sbr.rel (%p216) target = $region24
        $region23: #{tpu_custom_call.1} parent=11 // pred_region
          _
        $region24: #{tpu_custom_call.1} parent=11 // pred_fallthru
          _
        // Predicated region
        $region25: #{tpu_custom_call.1} parent=11 // pred_check
          %p219 = pneg %p167
        $region26: #{tpu_custom_call.1} parent=11 // pred_check_branch
          %221 = sbr.rel (%p219) target = $region28
        $region27: #{tpu_custom_call.1} parent=11 // pred_region
          _
        $region28: #{tpu_custom_call.1} parent=11 // pred_fallthru
          _
      $region12: #{tpu_custom_call.1} parent=5 // pred_fallthru
        _
      %p222 = scmp.lt.s32.totalorder %s15, 2
      // Predicated region
      $region29: #{tpu_custom_call.1} parent=5 // pred_check
        %p223 = pneg %p222
      $region30: #{tpu_custom_call.1} parent=5 // pred_check_branch
        %225 = sbr.rel (%p223) target = $region32
      $region31: #{tpu_custom_call.1} parent=5 // pred_region
        // Predicated region
        $region33: #{tpu_custom_call.1} parent=31 // pred_check
          %p226 = pneg %p49
        $region34: #{tpu_custom_call.1} parent=31 // pred_check_branch
          %228 = sbr.rel (%p226) target = $region36
        $region35: #{tpu_custom_call.1} parent=31 // pred_region
          %s229 = smul.u32 2, %s23
          %p230 = scmp.lt.s32.totalorder %s22, 1
          %s231 = scalar_select %p230, %s22, 1
          %p232 = scmp.lt.s32.totalorder %s229, 1
          %s233 = scalar_select %p232, %s229, 1
          %s234 = smul.addr %s231, 2
          %s235 = sadd.s32 %s233, %s234
          %s236 = smul.addr %s235, 4
          %s237 = scalar_lea.vmem %s0, %s236
          %s238 = smul.u32 2, %s23
        $region36: #{tpu_custom_call.1} parent=31 // pred_fallthru
          _
        // Predicated region
        $region37: #{tpu_custom_call.1} parent=31 // pred_check
          %p239 = pneg %p77
        $region38: #{tpu_custom_call.1} parent=31 // pred_check_branch
          %241 = sbr.rel (%p239) target = $region40
        $region39: #{tpu_custom_call.1} parent=31 // pred_region
          %s242 = smul.u32 2, %s23
          %p243 = scmp.lt.s32.totalorder %s22, 1
          %s244 = scalar_select %p243, %s22, 1
          %p245 = scmp.lt.s32.totalorder %s242, 1
          %s246 = scalar_select %p245, %s242, 1
          %s247 = smul.addr %s244, 2
          %s248 = sadd.s32 %s246, %s247
          %s249 = smul.addr %s248, 8
          %s250 = scalar_lea.vmem %s1, %s249
          %s251 = smul.u32 2, %s23
        $region40: #{tpu_custom_call.1} parent=31 // pred_fallthru
          _
      $region32: #{tpu_custom_call.1} parent=5 // pred_fallthru
        _
      %p252 = scmp.le.s32.totalorder 1, %s15
      %p253 = scmp.lt.s32.totalorder %s15, 3
      %p254 = pnand %p252, %p253
      %p255 = pneg %p254
      // Predicated region
      $region41: #{tpu_custom_call.1} parent=5 // pred_check
        _
      $region42: #{tpu_custom_call.1} parent=5 // pred_check_branch
        %257 = sbr.rel (%p254) target = $region44
      $region43: #{tpu_custom_call.1} parent=5 // pred_region
        %s258 = ssub.s32 %s15, 1
        %s259 = smul.u32 2, %s25
        %p260 = scmp.lt.s32.totalorder %s24, 1
        %s261 = scalar_select %p260, %s24, 1
        %p262 = scmp.lt.s32.totalorder %s259, 1
        %s263 = scalar_select %p262, %s259, 1
        %s264 = smul.addr %s261, 2
        %s265 = sadd.s32 %s263, %s264
        %s266 = smul.addr %s265, 4
        %s267 = scalar_lea.vmem %s0, %s266
        %p268 = pneg %p55
        %p269 = pneg %p52
        %s270 = smul.u32 2, %s25
        %p271 = scmp.lt.s32.totalorder %s24, 1
        %s272 = scalar_select %p271, %s24, 1
        %p273 = scmp.lt.s32.totalorder %s270, 1
        %s274 = scalar_select %p273, %s270, 1
        %s275 = smul.addr %s272, 2
        %s276 = sadd.s32 %s274, %s275
        %s277 = smul.addr %s276, 8
        %s278 = scalar_lea.vmem %s1, %s277
        %p279 = pneg %p83
        %p280 = pneg %p80
        %p281 = pneg %p104
        %p282 = pneg %p101
        %p283 = pneg %p125
        %p284 = pneg %p122
        %p285 = pneg %p146
        %p286 = pneg %p143
        %p287 = pneg %p167
        %p288 = pneg %p164
        %p289 = pneg %p195
        %p290 = pneg %p192
        %s291 = sand.u32 %s182, 1
        %s292 = scalar_lea.sflag [#allocation3], %s291
        %s293 = sand.u32 %s182, 1
        %s294 = smul.addr %s293, 16
        %s295 = scalar_lea.vmem [#allocation2], %s294
        %s296 = smul.u32 2, %s25
        %p297 = scmp.lt.s32.totalorder %s24, 1
        %s298 = scalar_select %p297, %s24, 1
        %p299 = scmp.lt.s32.totalorder %s296, 1
        %s300 = scalar_select %p299, %s296, 1
        %s301 = smul.addr %s298, 2
        %s302 = sadd.s32 %s300, %s301
        %s303 = smul.addr %s302, 4
        %s304 = scalar_lea.vmem %s0, %s303
        %s305 = smul.u32 2, %s25
        %s306 = smul.u32 2, %s25
        %p307 = scmp.lt.s32.totalorder %s24, 1
        %s308 = scalar_select %p307, %s24, 1
        %p309 = scmp.lt.s32.totalorder %s306, 1
        %s310 = scalar_select %p309, %s306, 1
        %s311 = smul.addr %s308, 2
        %s312 = sadd.s32 %s310, %s311
        %s313 = smul.addr %s312, 8
        %s314 = scalar_lea.vmem %s1, %s313
        %s315 = smul.u32 2, %s25
        %s316 = smul.u32 2, %s25
        %v317 = vld [vmem:[%s2] sm:$0xff]
        %v318 = vld [vmem:[%s304] sm:$0xff]
        %v319 = vld [vmem:[%s3] sm:$0xff]
        %321 = vset.pattern.permute.xlu0 0
        %322 = vperm.xlu0 %321, %v319
        %v323 = vpop.permute.xlu0 %322
        %v326 = vcombine.high %v318, %v318
        %vm327 = vcmask 31744
        %v329 = vsel %vm327, %v317, 0
        %vm331 = vcmask 1043456
        %v332 = vsel %vm331, %v318, 0
        %v334 = vsel %vm331, %v326, 0
        %336 = vmatprep.subr.mxu0 0.0
        %337 = vmatpush1.msra.mxu0 0.0
        %338 = vmatprep.subr.mxu0 0.0
        %339 = vmatpush1.msra.mxu0 0.0
        %340 = vmatprep.subr.mxu0 0.0
        %341 = vmatpush1.msra.mxu0 0.0
        %342 = vmatprep.subr.mxu0 0.0
        %343 = vmatpush1.msra.mxu0 0.0
        %344 = vmatprep.subr.mxu0 0.0
        %345 = vmatpush1.msra.mxu0 0.0
        %346 = vmatprep.subr.mxu0 0.0
        %347 = vmatpush1.msra.mxu0 0.0
        %348 = vmatprep.subr.mxu0 0.0
        %349 = vmatpush1.msra.mxu0 0.0
        %350 = vmatprep.subr.mxu0 0.0
        %351 = vmatpush1.msra.mxu0 0.0
        %352 = vmatprep.subr.mxu0 0.0
        %353 = vmatpush1.msra.mxu0 0.0
        %354 = vmatprep.subr.mxu0 0.0
        %355 = vmatpush1.msra.mxu0 0.0
        %356 = vmatprep.subr.mxu0 0.0
        %357 = vmatpush1.msra.mxu0 0.0
        %358 = vmatprep.subr.mxu0 0.0
        %359 = vmatpush1.msra.mxu0 0.0
        %360 = vmatprep.subr.mxu0 0.0
        %361 = vmatpush1.msra.mxu0 0.0
        %362 = vmatprep.subr.mxu0 0.0
        %363 = vmatpush1.msra.mxu0 0.0
        %364 = vmatprep.subr.mxu0 0.0
        %365 = vmatpush1.msra.mxu0 0.0
        %366 = vmatprep.subr.mxu0 %v334
        %367 = vmatpush1.msra.mxu0 %v332
        %368 = vmatprep.subr.mxu0 0.0
        %369 = vmatpush2.msra.mxu0 0.0
        %370 = vmatprep.subr.mxu0 0.0
        %371 = vmatpush2.msra.mxu0 0.0
        %372 = vmatprep.subr.mxu0 0.0
        %373 = vmatpush2.msra.mxu0 0.0
        %374 = vmatprep.subr.mxu0 0.0
        %375 = vmatpush2.msra.mxu0 0.0
        %376 = vmatprep.subr.mxu0 0.0
        %377 = vmatpush2.msra.mxu0 0.0
        %378 = vmatprep.subr.mxu0 0.0
        %379 = vmatpush2.msra.mxu0 0.0
        %380 = vmatprep.subr.mxu0 0.0
        %381 = vmatpush2.msra.mxu0 0.0
        %382 = vmatprep.subr.mxu0 0.0
        %383 = vmatpush2.msra.mxu0 0.0
        %384 = vmatprep.subr.mxu0 0.0
        %385 = vmatpush2.msra.mxu0 0.0
        %386 = vmatprep.subr.mxu0 0.0
        %387 = vmatpush2.msra.mxu0 0.0
        %388 = vmatprep.subr.mxu0 0.0
        %389 = vmatpush2.msra.mxu0 0.0
        %390 = vmatprep.subr.mxu0 0.0
        %391 = vmatpush2.msra.mxu0 0.0
        %392 = vmatprep.subr.mxu0 0.0
        %393 = vmatpush2.msra.mxu0 0.0
        %394 = vmatprep.subr.mxu0 0.0
        %395 = vmatpush2.msra.mxu0 0.0
        %396 = vmatprep.subr.mxu0 0.0
        %397 = vmatpush2.msra.mxu0 0.0
        %398 = vmatprep.subr.mxu0 0.0
        %399 = vmatpush2.msra.mxu0 0.0
        %400 = vmatprep.mubr.f32.mxu0 0.0
        %401 = vmatmul.mubr.f32.gmra.mxu0 %v329
        %v402 = vpop.f32.mrf.mxu0
        %v403 = vadd.f32 %v323, %v402
        %v404 = vpop.f32.mrf.mxu0
        %v405 = vadd.f32 %v323, %v404
        %406 = vdwg.mxu0
        %vm407 = vcmp.ge.f32.partialorder %v403, 0.0
        %vm408 = vcmp.ge.f32.partialorder %v405, 0.0
        %v409 = vmul.f32 %v403, 0.1
        %v410 = vmul.f32 %v405, 0.1
        %v411 = vsel %vm407, %v403, %v409
        %v412 = vsel %vm408, %v405, %v410
        %v413 = vld [vmem:[%s4] sm:$0xff]
        %v414 = vld [vmem:[%s314] sm:$0x3f]
        %v415 = vld [vmem:[%s314 + $0x8] sm:$0x3f]
        %v416 = vld [vmem:[%s5] sm:$0xff]
        %418 = vset.pattern.permute.xlu0 0
        %419 = vperm.xlu0 %418, %v416
        %v420 = vpop.permute.xlu0 %419
        %vm422 = vcmask 48128
        %v424 = vsel %vm422, %v413, 0
        %vm426 = vcmask 1045504
        %v428 = vsel %vm426, %v414, 0
        %v431 = vsel %vm426, %v415, 0
        %433 = vmatprep.subr.mxu0 0.0
        %434 = vmatpush1.msra.mxu0 0.0
        %435 = vmatprep.subr.mxu0 0.0
        %436 = vmatpush1.msra.mxu0 0.0
        %437 = vmatprep.subr.mxu0 0.0
        %438 = vmatpush1.msra.mxu0 0.0
        %439 = vmatprep.subr.mxu0 0.0
        %440 = vmatpush1.msra.mxu0 0.0
        %441 = vmatprep.subr.mxu0 0.0
        %442 = vmatpush1.msra.mxu0 0.0
        %443 = vmatprep.subr.mxu0 0.0
        %444 = vmatpush1.msra.mxu0 0.0
        %445 = vmatprep.subr.mxu0 0.0
        %446 = vmatpush1.msra.mxu0 0.0
        %447 = vmatprep.subr.mxu0 0.0
        %448 = vmatpush1.msra.mxu0 0.0
        %449 = vmatprep.subr.mxu0 0.0
        %450 = vmatpush1.msra.mxu0 0.0
        %451 = vmatprep.subr.mxu0 0.0
        %452 = vmatpush1.msra.mxu0 0.0
        %453 = vmatprep.subr.mxu0 0.0
        %454 = vmatpush1.msra.mxu0 0.0
        %455 = vmatprep.subr.mxu0 0.0
        %456 = vmatpush1.msra.mxu0 0.0
        %457 = vmatprep.subr.mxu0 0.0
        %458 = vmatpush1.msra.mxu0 0.0
        %459 = vmatprep.subr.mxu0 0.0
        %460 = vmatpush1.msra.mxu0 0.0
        %461 = vmatprep.subr.mxu0 0.0
        %462 = vmatpush1.msra.mxu0 0.0
        %463 = vmatprep.subr.mxu0 %v431
        %464 = vmatpush1.msra.mxu0 %v428
        %465 = vmatprep.subr.mxu0 0.0
        %466 = vmatpush2.msra.mxu0 0.0
        %467 = vmatprep.subr.mxu0 0.0
        %468 = vmatpush2.msra.mxu0 0.0
        %469 = vmatprep.subr.mxu0 0.0
        %470 = vmatpush2.msra.mxu0 0.0
        %471 = vmatprep.subr.mxu0 0.0
        %472 = vmatpush2.msra.mxu0 0.0
        %473 = vmatprep.subr.mxu0 0.0
        %474 = vmatpush2.msra.mxu0 0.0
        %475 = vmatprep.subr.mxu0 0.0
        %476 = vmatpush2.msra.mxu0 0.0
        %477 = vmatprep.subr.mxu0 0.0
        %478 = vmatpush2.msra.mxu0 0.0
        %479 = vmatprep.subr.mxu0 0.0
        %480 = vmatpush2.msra.mxu0 0.0
        %481 = vmatprep.subr.mxu0 0.0
        %482 = vmatpush2.msra.mxu0 0.0
        %483 = vmatprep.subr.mxu0 0.0
        %484 = vmatpush2.msra.mxu0 0.0
        %485 = vmatprep.subr.mxu0 0.0
        %486 = vmatpush2.msra.mxu0 0.0
        %487 = vmatprep.subr.mxu0 0.0
        %488 = vmatpush2.msra.mxu0 0.0
        %489 = vmatprep.subr.mxu0 0.0
        %490 = vmatpush2.msra.mxu0 0.0
        %491 = vmatprep.subr.mxu0 0.0
        %492 = vmatpush2.msra.mxu0 0.0
        %493 = vmatprep.subr.mxu0 0.0
        %494 = vmatpush2.msra.mxu0 0.0
        %495 = vmatprep.subr.mxu0 0.0
        %496 = vmatpush2.msra.mxu0 0.0
        %497 = vmatprep.mubr.f32.mxu0 0.0
        %498 = vmatmul.mubr.f32.gmra.mxu0 %v424
        %v499 = vpop.f32.mrf.mxu0
        %v500 = vadd.f32 %v420, %v499
        %v501 = vpop.f32.mrf.mxu0
        %v502 = vadd.f32 %v420, %v501
        %503 = vdwg.mxu0
        %vm504 = vcmp.ge.f32.partialorder %v500, 0.0
        %vm505 = vcmp.ge.f32.partialorder %v502, 0.0
        %v506 = vmul.f32 %v500, 0.1
        %v507 = vmul.f32 %v502, 0.1
        %v508 = vsel %vm504, %v500, %v506
        %v509 = vsel %vm505, %v502, %v507
        %v510 = vadd.f32 %v411, %v508
        %v511 = vadd.f32 %v412, %v509
        %vm512 = vcmp.ge.f32.partialorder %v510, 0.0
        %vm513 = vcmp.ge.f32.partialorder %v511, 0.0
        %v514 = vmul.f32 %v510, 0.1
        %v515 = vmul.f32 %v511, 0.1
        %v516 = vsel %vm512, %v510, %v514
        %v517 = vsel %vm513, %v511, %v515
        %518 = vst [vmem:[%s295] sm:$0xff] %v516
        %519 = vst [vmem:[%s295 + $0x8] sm:$0xff] %v517
        %s520 = sand.u32 %s182, 1
        %s521 = scalar_lea.sflag [#allocation3], %s520
        %s522 = sand.u32 %s182, 1
        %s523 = smul.addr %s522, 16
        %s524 = scalar_lea.vmem [#allocation2], %s523
        // Predicated region
        $region45: #{tpu_custom_call.1} parent=43 // pred_check
          %p525 = pneg %p192
        $region46: #{tpu_custom_call.1} parent=43 // pred_check_branch
          %527 = sbr.rel (%p525) target = $region48
        $region47: #{tpu_custom_call.1} parent=43 // pred_region
          %s528 = smul.u32 2, %s25
          %s530 = ssub.s32 256, 256
          %531 = vsyncadd %s521, %s530
          %s532 = smul.addr %s24, 2
          %s533 = sadd.s32 %s528, %s532
          %s534 = smul.addr %s533, 128
          %s535 = scalar_lea.hbm %s6, %s534
          %s537 = sshll.u32 %s524, 4
          %s538 = int_to_ptr.vmem [resolvable:$true] %s537
          %540 = dma.vmem_to_hbm [thread:$0]  %s538, 256, %s535, %s521
        $region48: #{tpu_custom_call.1} parent=43 // pred_fallthru
          _
      $region44: #{tpu_custom_call.1} parent=5 // pred_fallthru
        _
      %p541 = scmp.le.s32.totalorder 2, %s15
      // Predicated region
      $region49: #{tpu_custom_call.1} parent=5 // pred_check
        %p542 = pneg %p541
      $region50: #{tpu_custom_call.1} parent=5 // pred_check_branch
        %544 = sbr.rel (%p542) target = $region52
      $region51: #{tpu_custom_call.1} parent=5 // pred_region
        %s545 = ssub.s32 %s15, 2
        // Predicated region
        $region53: #{tpu_custom_call.1} parent=51 // pred_check
          %p546 = pneg %p198
        $region54: #{tpu_custom_call.1} parent=51 // pred_check_branch
          %548 = sbr.rel (%p546) target = $region56
        $region55: #{tpu_custom_call.1} parent=51 // pred_region
          %s549 = sand.u32 %s183, 1
          %s550 = scalar_lea.sflag [#allocation3], %s549
          %s551 = sand.u32 %s183, 1
          %s552 = smul.addr %s551, 16
          %s553 = scalar_lea.vmem [#allocation2], %s552
          %554 = dma.done %s550, 256
        $region56: #{tpu_custom_call.1} parent=51 // pred_fallthru
          _
      $region52: #{tpu_custom_call.1} parent=5 // pred_fallthru
        _
    $region6: #{tpu_custom_call.1} parent=1 // loop_footer
      %s19 = sadd.s32 1, %s15
    $region7: #{tpu_custom_call.1} parent=1 // loop_footer_branch
      %14 = sbr.rel target = $region3
    $region8: #{tpu_custom_call.1} parent=1 // loop_exit
      _
    %555 = vsyncpa [#allocation3], 1
    %s556 = scalar_lea.sflag [#allocation3], 1
    %557 = vsyncpa %s556, 1

</llo_original>
